<compile_context>
chip_gen: v6e
topology: v6e:2x2x1
jax: 0.10.0
libtpu: 0.0.40
codegen_flags: <defaults>
</compile_context>

<pallas_src>
import functools

import jax
import jax.numpy as jnp
from jax.experimental import pallas as pl
from jax.experimental.pallas import tpu as pltpu

LN_EPS = 1e-5  # torch.nn.LayerNorm default


def _fused_kernel(x_ref, w0_ref, w1_ref, bias_ref, o_ref):
    # x_ref    : (th, 2, W2, 2C)  -- dim 1 is h%2; lanes pack (w%2, C)
    # w0_ref   : (out, 2C)        -- gamma-folded weight cols for the h%2==0 half
    # w1_ref   : (out, 2C)        -- gamma-folded weight cols for the h%2==1 half
    # bias_ref : (1, out) f32     -- beta @ W^T
    # o_ref    : (th, W2, out)
    xb = x_ref[...]
    th, _, w2, c2 = xb.shape
    rows = th * w2
    c4 = 2 * c2

    # Leading-dim flatten only (no 4C lane concat); free when W2 % 8 == 0,
    # and at worst a sublane-level relayout of half the data each.
    x0 = xb[:, 0].reshape(rows, c2).astype(jnp.float32)
    x1 = xb[:, 1].reshape(rows, c2).astype(jnp.float32)

    # One-pass LayerNorm statistics over the full 4C (order-invariant), in f32.
    inv_c4 = 1.0 / c4
    s = jnp.sum(x0, axis=-1, keepdims=True) + jnp.sum(x1, axis=-1, keepdims=True)
    ss = (jnp.sum(x0 * x0, axis=-1, keepdims=True)
          + jnp.sum(x1 * x1, axis=-1, keepdims=True))
    mean = s * inv_c4
    var = ss * inv_c4 - mean * mean          # E[x^2] - mean^2 (f32)
    rstd = jax.lax.rsqrt(var + LN_EPS)

    xn0 = ((x0 - mean) * rstd).astype(w0_ref.dtype)
    xn1 = ((x1 - mean) * rstd).astype(w1_ref.dtype)

    # Two NT matmuls against the pre-split halves; f32 MXU accumulation.
    nt = (((1,), (1,)), ((), ()))
    y = jax.lax.dot_general(xn0, w0_ref[...], nt,
                            preferred_element_type=jnp.float32)
    y = y + jax.lax.dot_general(xn1, w1_ref[...], nt,
                                preferred_element_type=jnp.float32)
    y = y + bias_ref[...]                    # (rows, out) + (1, out)
    o_ref[...] = y.reshape(th, w2, -1).astype(o_ref.dtype)


def _chip_vmem_bytes():
    try:
        return int(pltpu.get_tpu_info().vmem_capacity_bytes)
    except Exception:
        return 64 * 1024 * 1024  # assume the smallest (v7x-class) part


def _vmem_config():
    phys = _chip_vmem_bytes()
    if phys <= 64 * 1024 * 1024:
        # v7x-class (64 MiB / TC, 3.2 TB/s): bigger per-step tiles amortize the
        # fixed grid-step overhead; keep headroom under the 64 MiB physical.
        return {"limit": 48 << 20, "budget": 22 << 20, "target_rows": 4096}
    # v5e / v6e: 128 MiB physical -> plenty of headroom for large-C stages.
    return {"limit": 64 << 20, "budget": 36 << 20, "target_rows": 2048}


def _pick_block_rows(n_outer, w2, c, out_dim, x_bytes, mxu_bytes, cfg):
    """(batch * H/2) rows per grid step -- static Python int."""
    c2, c4 = 2 * c, 4 * c
    per_th = (2 * (2 * w2 * c2) * x_bytes      # input block, double-buffered
              + 2 * (w2 * out_dim) * x_bytes   # output block, double-buffered
              + w2 * c4 * 4                    # f32 normalized halves
              + w2 * c4 * mxu_bytes            # MXU-dtype matmul operands
              + w2 * out_dim * 4)              # f32 accumulator
    # Grid-invariant operands (w0, w1, bias) are still double-buffered by the
    # pipeliner -> account for 2x their size.
    # TODO(synk): single-buffer them (pipeline_mode=pl.Buffered(1)) once that
    #             path is verified everywhere; accounted at 2x here instead.
    resident = 2 * (2 * out_dim * c2 * mxu_bytes + out_dim * 4)
    avail = max(cfg["budget"] - resident, per_th)
    th = max(1, avail // per_th)
    th = min(th, max(1, cfg["target_rows"] // w2))   # amortize per-step overhead
    # >= 8 grid steps when possible: 4+ per TensorCore keeps the DMA pipeline
    # full on v7x's two cores (and still shards/pipelines on 1-core chips).
    th = min(th, pl.cdiv(n_outer, min(n_outer, 8)))
    return int(max(1, min(th, n_outer)))


@functools.partial(jax.jit, static_argnames=("mxu_dtype",))
def patch_merging_2d(x, gamma, beta, weight, *, mxu_dtype=None):
    """PatchMerging2D forward (channel-last).

    x      : (B, H, W, C)
    gamma  : (4C,)          LayerNorm weight
    beta   : (4C,)          LayerNorm bias
    weight : (out_dim, 4C)  nn.Linear weight (PyTorch layout, bias=False)
    returns: (B, ceil(H/2), ceil(W/2), out_dim)
    """
    B, H, W, C = x.shape
    out_dim, c4 = weight.shape
    assert c4 == 4 * C, (weight.shape, C)

    if mxu_dtype is None:
        # bf16 MXU operands (f32 accumulation) when the model arrives in f32:
        # required for good MXU throughput on v6e and essentially mandatory on
        # v7x (bf16/fp8-only MXU).  Neutral when mem-bound.
        mxu_dtype = jnp.bfloat16 if x.dtype == jnp.float32 else x.dtype
    mxu_dtype = jnp.dtype(mxu_dtype)

    pad_h, pad_w = H % 2, W % 2
    if pad_h or pad_w:   # zero-pad, matching F.pad in the torch module
        x = jnp.pad(x, ((0, 0), (0, pad_h), (0, pad_w), (0, 0)))
    H2, W2 = (H + pad_h) // 2, (W + pad_w) // 2
    n_outer = B * H2

    # Free (layout-preserving) reshape: (B, 2*H2, 2*W2, C) -> (B*H2, 2, W2, 2C).
    xr = x.reshape(n_outer, 2, W2, 2 * C)

    # Grid-invariant param prep, hoisted to the wrapper:
    #   * fold gamma into the weight columns, precompute bias = W @ beta,
    #   * split the columns into the kernel's two h%2 halves:
    #       half 0 lanes = [x0 | x2]   (h even; w even | w odd)
    #       half 1 lanes = [x1 | x3]   (h odd;  w even | w odd)
    #     (module/PyTorch column order is [x0, x1, x2, x3]).
    w_f32 = weight.astype(jnp.float32) * gamma.astype(jnp.float32)[None, :]
    bias = (weight.astype(jnp.float32) @ beta.astype(jnp.float32)
            ).reshape(1, out_dim)
    w0 = jnp.concatenate([w_f32[:, 0:C], w_f32[:, 2 * C:3 * C]],
                         axis=1).astype(mxu_dtype)
    w1 = jnp.concatenate([w_f32[:, C:2 * C], w_f32[:, 3 * C:4 * C]],
                         axis=1).astype(mxu_dtype)

    cfg = _vmem_config()
    th = _pick_block_rows(n_outer, W2, C, out_dim, x.dtype.itemsize,
                          mxu_dtype.itemsize, cfg)
    grid = (pl.cdiv(n_outer, th),)   # partial last block OK: rows independent

    out = pl.pallas_call(
        _fused_kernel,
        out_shape=jax.ShapeDtypeStruct((n_outer, W2, out_dim), x.dtype),
        grid_spec=pltpu.PrefetchScalarGridSpec(
            num_scalar_prefetch=0,
            grid=grid,
            in_specs=[
                pl.BlockSpec((th, 2, W2, 2 * C), lambda i: (i, 0, 0, 0)),
                pl.BlockSpec((out_dim, 2 * C), lambda i: (0, 0)),
                pl.BlockSpec((out_dim, 2 * C), lambda i: (0, 0)),
                pl.BlockSpec((1, out_dim), lambda i: (0, 0)),
            ],
            out_specs=pl.BlockSpec((th, W2, out_dim), lambda i: (i, 0, 0)),
        ),
        compiler_params=pltpu.CompilerParams(
            dimension_semantics=("parallel",),
            vmem_limit_bytes=cfg["limit"]),
    )(xr, w0, w1, bias)

    return out.reshape(B, H2, W2, out_dim)


def _reference(x, gamma, beta, weight):
    B, H, W, C = x.shape
    pad_h, pad_w = H % 2, W % 2
    if pad_h or pad_w:
        x = jnp.pad(x, ((0, 0), (0, pad_h), (0, pad_w), (0, 0)))
    x0 = x[:, 0::2, 0::2, :]
    x1 = x[:, 1::2, 0::2, :]
    x2 = x[:, 0::2, 1::2, :]
    x3 = x[:, 1::2, 1::2, :]
    merged = jnp.concatenate([x0, x1, x2, x3], axis=-1).astype(jnp.float32)
    mean = jnp.mean(merged, axis=-1, keepdims=True)
    var = jnp.mean((merged - mean) ** 2, axis=-1, keepdims=True)
    xn = (merged - mean) / jnp.sqrt(var + LN_EPS)
    xn = xn * gamma.astype(jnp.float32) + beta.astype(jnp.float32)
    return jnp.einsum("bhwc,oc->bhwo", xn, weight.astype(jnp.float32))


if __name__ == "__main__":
    key = jax.random.PRNGKey(0)
    B, H, W, dim = 2, 16, 16, 4          # x: (B, H, W, C), channel-last
    out_dim = 2 * dim                    # module default out_dim = 2*dim

    k_x, k_g, k_b, k_w = jax.random.split(key, 4)
    x = jax.random.normal(k_x, (B, H, W, dim), dtype=jnp.float32)
    gamma = 1.0 + 0.1 * jax.random.normal(k_g, (4 * dim,), dtype=jnp.float32)
    beta = 0.1 * jax.random.normal(k_b, (4 * dim,), dtype=jnp.float32)
    # nn.Linear(4*dim, 2*dim, bias=False) weight: (out_dim, 4*dim)
    weight = (jax.random.normal(k_w, (out_dim, 4 * dim), dtype=jnp.float32)
              / jnp.sqrt(4.0 * dim))

    y_ref = _reference(x, gamma, beta, weight)

    # Exact-precision path (f32 MXU operands): tight check of the kernel math.
    y_f32 = jax.block_until_ready(
        patch_merging_2d(x, gamma, beta, weight, mxu_dtype=jnp.float32))
    assert y_f32.shape == (B, H // 2, W // 2, out_dim), y_f32.shape
    err_f32 = float(jnp.max(jnp.abs(y_f32 - y_ref)))
    assert jnp.allclose(y_f32, y_ref, atol=5e-4, rtol=5e-4), err_f32

    # Default fast path (bf16 MXU operands, f32 accumulation): looser check.
    y_bf16 = jax.block_until_ready(patch_merging_2d(x, gamma, beta, weight))
    err_bf16 = float(jnp.max(jnp.abs(y_bf16 - y_ref)))
    assert jnp.allclose(y_bf16, y_ref, atol=5e-2, rtol=5e-2), err_bf16

    print("KERNEL_OK")
</pallas_src>

<mosaic_0001>
module attributes {stable_mosaic.version = 11 : i64} {
  func.func @_fused_kernel(%arg0: i32, %arg1: memref<2x2x8x8xf32, #tpu.memory_space<vmem>>, %arg2: memref<8x8xf32, #tpu.memory_space<vmem>>, %arg3: memref<8x8xf32, #tpu.memory_space<vmem>>, %arg4: memref<1x8xf32, #tpu.memory_space<vmem>>, %arg5: memref<2x8x8xf32, #tpu.memory_space<vmem>>) attributes {dimension_semantics = [#tpu.dimension_semantics<parallel>], iteration_bounds = array<i64: 8>, scalar_prefetch = 0 : i64, scratch_operands = 0 : i64, tpu.core_type = #tpu.core_type<tc>, window_params = [{transform_indices = @transform_0, window_bounds = array<i64: 2, 2, 8, 8>}, {pipeline_mode = #tpu.pipeline_mode<synchronous>, transform_indices = @transform_1, window_bounds = array<i64: 8, 8>}, {pipeline_mode = #tpu.pipeline_mode<synchronous>, transform_indices = @transform_2, window_bounds = array<i64: 8, 8>}, {pipeline_mode = #tpu.pipeline_mode<synchronous>, transform_indices = @transform_3, window_bounds = array<i64: 1, 8>}, {transform_indices = @transform_4, window_bounds = array<i64: 2, 8, 8>}]} {
    %c0 = arith.constant 0 : index
    %c0_0 = arith.constant 0 : index
    %c0_1 = arith.constant 0 : index
    %c0_2 = arith.constant 0 : index
    %0 = vector.load %arg1[%c0, %c0_0, %c0_1, %c0_2] : memref<2x2x8x8xf32, #tpu.memory_space<vmem>>, vector<2x2x8x8xf32>
    %1 = vector.extract_strided_slice %0 {offsets = [0, 0, 0, 0], sizes = [2, 1, 8, 8], strides = [1, 1, 1, 1]} : vector<2x2x8x8xf32> to vector<2x1x8x8xf32>
    %2 = vector.shape_cast %1 : vector<2x1x8x8xf32> to vector<2x8x8xf32>
    %3 = vector.shape_cast %2 : vector<2x8x8xf32> to vector<16x8xf32>
    %4 = vector.extract_strided_slice %0 {offsets = [0, 1, 0, 0], sizes = [2, 1, 8, 8], strides = [1, 1, 1, 1]} : vector<2x2x8x8xf32> to vector<2x1x8x8xf32>
    %5 = vector.shape_cast %4 : vector<2x1x8x8xf32> to vector<2x8x8xf32>
    %6 = vector.shape_cast %5 : vector<2x8x8xf32> to vector<16x8xf32>
    %cst = arith.constant dense<0.000000e+00> : vector<16xf32>
    %7 = vector.multi_reduction <add>, %3, %cst [1] : vector<16x8xf32> to vector<16xf32>
    %8 = vector.shape_cast %7 : vector<16xf32> to vector<16x1xf32>
    %cst_3 = arith.constant dense<0.000000e+00> : vector<16xf32>
    %9 = vector.multi_reduction <add>, %6, %cst_3 [1] : vector<16x8xf32> to vector<16xf32>
    %10 = vector.shape_cast %9 : vector<16xf32> to vector<16x1xf32>
    %11 = arith.addf %8, %10 : vector<16x1xf32>
    %12 = arith.mulf %3, %3 : vector<16x8xf32>
    %cst_4 = arith.constant dense<0.000000e+00> : vector<16xf32>
    %13 = vector.multi_reduction <add>, %12, %cst_4 [1] : vector<16x8xf32> to vector<16xf32>
    %14 = vector.shape_cast %13 : vector<16xf32> to vector<16x1xf32>
    %15 = arith.mulf %6, %6 : vector<16x8xf32>
    %cst_5 = arith.constant dense<0.000000e+00> : vector<16xf32>
    %16 = vector.multi_reduction <add>, %15, %cst_5 [1] : vector<16x8xf32> to vector<16xf32>
    %17 = vector.shape_cast %16 : vector<16xf32> to vector<16x1xf32>
    %18 = arith.addf %14, %17 : vector<16x1xf32>
    %cst_6 = arith.constant 6.250000e-02 : f32
    %19 = vector.broadcast %cst_6 : f32 to vector<16x1xf32>
    %20 = arith.mulf %11, %19 : vector<16x1xf32>
    %cst_7 = arith.constant 6.250000e-02 : f32
    %21 = vector.broadcast %cst_7 : f32 to vector<16x1xf32>
    %22 = arith.mulf %18, %21 : vector<16x1xf32>
    %23 = arith.mulf %20, %20 : vector<16x1xf32>
    %24 = arith.subf %22, %23 : vector<16x1xf32>
    %cst_8 = arith.constant 9.99999974E-6 : f32
    %25 = vector.broadcast %cst_8 : f32 to vector<16x1xf32>
    %26 = arith.addf %24, %25 : vector<16x1xf32>
    %27 = math.rsqrt %26 : vector<16x1xf32>
    %28 = vector.broadcast %20 : vector<16x1xf32> to vector<16x8xf32>
    %29 = arith.subf %3, %28 : vector<16x8xf32>
    %30 = vector.broadcast %27 : vector<16x1xf32> to vector<16x8xf32>
    %31 = arith.mulf %29, %30 : vector<16x8xf32>
    %32 = vector.broadcast %20 : vector<16x1xf32> to vector<16x8xf32>
    %33 = arith.subf %6, %32 : vector<16x8xf32>
    %34 = vector.broadcast %27 : vector<16x1xf32> to vector<16x8xf32>
    %35 = arith.mulf %33, %34 : vector<16x8xf32>
    %c0_9 = arith.constant 0 : index
    %c0_10 = arith.constant 0 : index
    %36 = vector.load %arg2[%c0_9, %c0_10] : memref<8x8xf32, #tpu.memory_space<vmem>>, vector<8x8xf32>
    %cst_11 = arith.constant dense<0.000000e+00> : vector<16x8xf32>
    %37 = tpu.matmul %31, %36, %cst_11 {dimension_numbers = #tpu.dot_dimension_numbers<[1], [1], [0], [0], [0, 0, 1, 0], [], []>} : vector<16x8xf32>, vector<8x8xf32>, vector<16x8xf32> -> vector<16x8xf32>
    %c0_12 = arith.constant 0 : index
    %c0_13 = arith.constant 0 : index
    %38 = vector.load %arg3[%c0_12, %c0_13] : memref<8x8xf32, #tpu.memory_space<vmem>>, vector<8x8xf32>
    %cst_14 = arith.constant dense<0.000000e+00> : vector<16x8xf32>
    %39 = tpu.matmul %35, %38, %cst_14 {dimension_numbers = #tpu.dot_dimension_numbers<[1], [1], [0], [0], [0, 0, 1, 0], [], []>} : vector<16x8xf32>, vector<8x8xf32>, vector<16x8xf32> -> vector<16x8xf32>
    %40 = arith.addf %37, %39 : vector<16x8xf32>
    %c0_15 = arith.constant 0 : index
    %c0_16 = arith.constant 0 : index
    %41 = vector.load %arg4[%c0_15, %c0_16] : memref<1x8xf32, #tpu.memory_space<vmem>>, vector<1x8xf32>
    %42 = vector.broadcast %41 : vector<1x8xf32> to vector<16x8xf32>
    %43 = arith.addf %40, %42 : vector<16x8xf32>
    %44 = vector.shape_cast %43 : vector<16x8xf32> to vector<2x8x8xf32>
    %c0_17 = arith.constant 0 : index
    %c0_18 = arith.constant 0 : index
    %c0_19 = arith.constant 0 : index
    %45 = vector.load %arg5[%c0_17, %c0_18, %c0_19] : memref<2x8x8xf32, #tpu.memory_space<vmem>>, vector<2x8x8xf32>
    tpu.vector_store %arg5[%c0_17, %c0_18, %c0_19], %44 {strides = array<i32>} : memref<2x8x8xf32, #tpu.memory_space<vmem>>, vector<2x8x8xf32>,
    return
  }
  func.func @transform_0(%arg0: i32) -> (i32, i32, i32, i32) {
    %c0_i32 = arith.constant 0 : i32
    %c0_i32_0 = arith.constant 0 : i32
    %c0_i32_1 = arith.constant 0 : i32
    %c0_i32_2 = arith.constant 0 : i32
    return %arg0, %c0_i32, %c0_i32_0, %c0_i32_1 : i32, i32, i32, i32
  }
  func.func @transform_1(%arg0: i32) -> (i32, i32) {
    %c0_i32 = arith.constant 0 : i32
    %c0_i32_0 = arith.constant 0 : i32
    %c0_i32_1 = arith.constant 0 : i32
    return %c0_i32, %c0_i32_0 : i32, i32
  }
  func.func @transform_2(%arg0: i32) -> (i32, i32) {
    %c0_i32 = arith.constant 0 : i32
    %c0_i32_0 = arith.constant 0 : i32
    %c0_i32_1 = arith.constant 0 : i32
    return %c0_i32, %c0_i32_0 : i32, i32
  }
  func.func @transform_3(%arg0: i32) -> (i32, i32) {
    %c0_i32 = arith.constant 0 : i32
    %c0_i32_0 = arith.constant 0 : i32
    %c0_i32_1 = arith.constant 0 : i32
    return %c0_i32, %c0_i32_0 : i32, i32
  }
  func.func @transform_4(%arg0: i32) -> (i32, i32, i32) {
    %c0_i32 = arith.constant 0 : i32
    %c0_i32_0 = arith.constant 0 : i32
    %c0_i32_1 = arith.constant 0 : i32
    return %arg0, %c0_i32, %c0_i32_0 : i32, i32, i32
  }
}

</mosaic_0001>

<llo_original>
// kernel: patch_merging_2d.1
$region0: #{patch_merging_2d.1}
  #allocation0 [shape = 'u32[]', space=smem, size = 0x4, offset = 0x4, fixed_abs, tag = 'smem constant byte address 0x4 - core index']
  #allocation1 [shape = 'u32[144,128]{1,0:T(1,128)}', space=vmem, size = 0x12000, scoped, tag = 'internal scratch']
  %s0 = inlined_call_operand.vmem [shape: f32[16,2,8,8], index: 0, kind: input, shape index: {}]
  %s1 = inlined_call_operand.vmem [shape: f32[8,8], index: 1, kind: input, shape index: {}]
  %s2 = inlined_call_operand.vmem [shape: f32[8,8], index: 2, kind: input, shape index: {}]
  %s3 = inlined_call_operand.vmem [shape: f32[1,8], index: 3, kind: input, shape index: {}]
  %s4 = inlined_call_operand.hbm [shape: f32[16,8,8], index: 4, kind: output, shape index: {}]
  %s5 = sld [smem:[#allocation0]]
  $region49: #{patch_merging_2d.1} parent=0
    _
  %s7 = ssub.s32 1, %s5
  %s8 = scalar_select 0, %s7, %s5
  $region1: #{patch_merging_2d.1} parent=0
    #allocation2 [shape = 'u8[16384]{0}', space=vmem, size = 0x4000, scoped, tag = 'output window, operand 0']
    #allocation3 [shape = 's32[2]{0}', space=sflag, size = 0x8, scoped, tag = 'scoped memory for patch_merging_2d.1']
    %9 = vsyncpa [#allocation3], 0
    %s10 = scalar_lea.sflag [#allocation3], 1
    %11 = vsyncpa %s10, 0
    loop: start=0, step=1, limit=10
    $region2: #{patch_merging_2d.1} parent=1 // loop_pre_header
      _
    $region3: #{patch_merging_2d.1} parent=1 // loop_header
      %s13 = sphi 0, %s17
      %p14 = scmp.ge.s32.totalorder %s13, 10
      %s23 = sphi 0, %s25
      %s26 = sphi 0, %s23
      %s27 = sphi 0, %s26
      %s43 = sphi 0, %s27
      %s47 = sphi 0, %s47
      %s49 = sphi 0, %s47
      %s50 = sphi 0, %s49
      %s64 = sphi 0, %s50
      %s68 = sphi 0, %s68
      %s70 = sphi 0, %s68
      %s71 = sphi 0, %s70
      %s85 = sphi 0, %s71
      %s89 = sphi 0, %s89
      %s91 = sphi 0, %s89
      %s92 = sphi 0, %s91
      %s106 = sphi 0, %s92
      %s112 = sphi 0, %s114
      %s115 = sphi 0, %s112
      %s116 = sphi 0, %s115
      %s132 = sphi 0, %s116
    $region4: #{patch_merging_2d.1} parent=1 // loop_header_branch
      %16 = sbr.rel (%p14) target = $region8
    $region5: #{patch_merging_2d.1} parent=1 // loop_body
      %s18 = ssub.s32 %s13, 1
      %s19 = ssub.s32 %s13, 2
      %s20 = sadd.s32 %s13, 1
      %s21 = ssub.s32 %s13, %s20
      %p22 = scmp.eq.s32.totalorder %s21, 0
      %s24 = sadd.s32 %s23, 1
      %s25 = scalar_select %p22, %s23, %s24
      %p28 = pneg %p22
      %p29 = scmp.eq.s32.totalorder %s13, 7
      %p30 = por %p28, %p29
      %p31 = scmp.ne.s32.totalorder %s23, %s26
      %p32 = scmp.eq.s32.totalorder %s13, 0
      %p33 = por %p31, %p32
      %p34 = scmp.ne.s32.totalorder %s23, %s26
      %p35 = scmp.eq.s32.totalorder %s18, 7
      %p36 = por %p34, %p35
      %p37 = scmp.ne.s32.totalorder %s26, %s27
      %p38 = scmp.eq.s32.totalorder %s18, 0
      %p39 = por %p37, %p38
      %p40 = scmp.ne.s32.totalorder %s26, %s27
      %p41 = scmp.eq.s32.totalorder %s19, 7
      %p42 = por %p40, %p41
      %p44 = scmp.ne.s32.totalorder %s27, %s43
      %p45 = scmp.eq.s32.totalorder %s19, 0
      %p46 = por %p44, %p45
      %s48 = sadd.s32 %s47, 1
      %p51 = scmp.eq.s32.totalorder %s13, 7
      %p52 = scmp.ne.s32.totalorder %s47, %s49
      %p53 = scmp.eq.s32.totalorder %s13, 0
      %p54 = por %p52, %p53
      %p55 = scmp.ne.s32.totalorder %s47, %s49
      %p56 = scmp.eq.s32.totalorder %s18, 7
      %p57 = por %p55, %p56
      %p58 = scmp.ne.s32.totalorder %s49, %s50
      %p59 = scmp.eq.s32.totalorder %s18, 0
      %p60 = por %p58, %p59
      %p61 = scmp.ne.s32.totalorder %s49, %s50
      %p62 = scmp.eq.s32.totalorder %s19, 7
      %p63 = por %p61, %p62
      %p65 = scmp.ne.s32.totalorder %s50, %s64
      %p66 = scmp.eq.s32.totalorder %s19, 0
      %p67 = por %p65, %p66
      %s69 = sadd.s32 %s68, 1
      %p72 = scmp.eq.s32.totalorder %s13, 7
      %p73 = scmp.ne.s32.totalorder %s68, %s70
      %p74 = scmp.eq.s32.totalorder %s13, 0
      %p75 = por %p73, %p74
      %p76 = scmp.ne.s32.totalorder %s68, %s70
      %p77 = scmp.eq.s32.totalorder %s18, 7
      %p78 = por %p76, %p77
      %p79 = scmp.ne.s32.totalorder %s70, %s71
      %p80 = scmp.eq.s32.totalorder %s18, 0
      %p81 = por %p79, %p80
      %p82 = scmp.ne.s32.totalorder %s70, %s71
      %p83 = scmp.eq.s32.totalorder %s19, 7
      %p84 = por %p82, %p83
      %p86 = scmp.ne.s32.totalorder %s71, %s85
      %p87 = scmp.eq.s32.totalorder %s19, 0
      %p88 = por %p86, %p87
      %s90 = sadd.s32 %s89, 1
      %p93 = scmp.eq.s32.totalorder %s13, 7
      %p94 = scmp.ne.s32.totalorder %s89, %s91
      %p95 = scmp.eq.s32.totalorder %s13, 0
      %p96 = por %p94, %p95
      %p97 = scmp.ne.s32.totalorder %s89, %s91
      %p98 = scmp.eq.s32.totalorder %s18, 7
      %p99 = por %p97, %p98
      %p100 = scmp.ne.s32.totalorder %s91, %s92
      %p101 = scmp.eq.s32.totalorder %s18, 0
      %p102 = por %p100, %p101
      %p103 = scmp.ne.s32.totalorder %s91, %s92
      %p104 = scmp.eq.s32.totalorder %s19, 7
      %p105 = por %p103, %p104
      %p107 = scmp.ne.s32.totalorder %s92, %s106
      %p108 = scmp.eq.s32.totalorder %s19, 0
      %p109 = por %p107, %p108
      %s110 = ssub.s32 %s13, %s20
      %p111 = scmp.eq.s32.totalorder %s110, 0
      %s113 = sadd.s32 %s112, 1
      %s114 = scalar_select %p111, %s112, %s113
      %p117 = pneg %p111
      %p118 = scmp.eq.s32.totalorder %s13, 7
      %p119 = por %p117, %p118
      %p120 = scmp.ne.s32.totalorder %s112, %s115
      %p121 = scmp.eq.s32.totalorder %s13, 0
      %p122 = por %p120, %p121
      %p123 = scmp.ne.s32.totalorder %s112, %s115
      %p124 = scmp.eq.s32.totalorder %s18, 7
      %p125 = por %p123, %p124
      %p126 = scmp.ne.s32.totalorder %s115, %s116
      %p127 = scmp.eq.s32.totalorder %s18, 0
      %p128 = por %p126, %p127
      %p129 = scmp.ne.s32.totalorder %s115, %s116
      %p130 = scmp.eq.s32.totalorder %s19, 7
      %p131 = por %p129, %p130
      %p133 = scmp.ne.s32.totalorder %s116, %s132
      %p134 = scmp.eq.s32.totalorder %s19, 0
      %p135 = por %p133, %p134
      %p136 = scmp.le.s32.totalorder 1, %s13
      %p137 = scmp.lt.s32.totalorder %s13, 9
      %p138 = pnand %p136, %p137
      %p139 = pneg %p138
      // Predicated region
      $region9: #{patch_merging_2d.1} parent=5 // pred_check
        _
      $region10: #{patch_merging_2d.1} parent=5 // pred_check_branch
        %141 = sbr.rel (%p138) target = $region12
      $region11: #{patch_merging_2d.1} parent=5 // pred_region
        %s142 = ssub.s32 %s13, 1
        // Predicated region
        $region13: #{patch_merging_2d.1} parent=11 // pred_check
          %p143 = pneg %p60
        $region14: #{patch_merging_2d.1} parent=11 // pred_check_branch
          %145 = sbr.rel (%p143) target = $region16
        $region15: #{patch_merging_2d.1} parent=11 // pred_region
          _
        $region16: #{patch_merging_2d.1} parent=11 // pred_fallthru
          _
        // Predicated region
        $region17: #{patch_merging_2d.1} parent=11 // pred_check
          %p146 = pneg %p81
        $region18: #{patch_merging_2d.1} parent=11 // pred_check_branch
          %148 = sbr.rel (%p146) target = $region20
        $region19: #{patch_merging_2d.1} parent=11 // pred_region
          _
        $region20: #{patch_merging_2d.1} parent=11 // pred_fallthru
          _
        // Predicated region
        $region21: #{patch_merging_2d.1} parent=11 // pred_check
          %p149 = pneg %p102
        $region22: #{patch_merging_2d.1} parent=11 // pred_check_branch
          %151 = sbr.rel (%p149) target = $region24
        $region23: #{patch_merging_2d.1} parent=11 // pred_region
          _
        $region24: #{patch_merging_2d.1} parent=11 // pred_fallthru
          _
      $region12: #{patch_merging_2d.1} parent=5 // pred_fallthru
        _
      %p152 = scmp.lt.s32.totalorder %s13, 8
      // Predicated region
      $region25: #{patch_merging_2d.1} parent=5 // pred_check
        %p153 = pneg %p152
      $region26: #{patch_merging_2d.1} parent=5 // pred_check_branch
        %155 = sbr.rel (%p153) target = $region28
      $region27: #{patch_merging_2d.1} parent=5 // pred_region
        // Predicated region
        $region29: #{patch_merging_2d.1} parent=27 // pred_check
          %p156 = pneg %p33
        $region30: #{patch_merging_2d.1} parent=27 // pred_check_branch
          %158 = sbr.rel (%p156) target = $region32
        $region31: #{patch_merging_2d.1} parent=27 // pred_region
          %s159 = smul.u32 2, %s13
          %p160 = scmp.lt.s32.totalorder %s159, 15
          %s161 = scalar_select %p160, %s159, 15
          %s162 = smul.addr %s161, 2
          %s163 = smul.addr %s162, 8
          %s164 = scalar_lea.vmem %s0, %s163
          %s165 = smul.u32 2, %s13
        $region32: #{patch_merging_2d.1} parent=27 // pred_fallthru
          _
      $region28: #{patch_merging_2d.1} parent=5 // pred_fallthru
        _
      %p166 = scmp.le.s32.totalorder 1, %s13
      %p167 = scmp.lt.s32.totalorder %s13, 9
      %p168 = pnand %p166, %p167
      %p169 = pneg %p168
      // Predicated region
      $region33: #{patch_merging_2d.1} parent=5 // pred_check
        _
      $region34: #{patch_merging_2d.1} parent=5 // pred_check_branch
        %171 = sbr.rel (%p168) target = $region36
      $region35: #{patch_merging_2d.1} parent=5 // pred_region
        %s172 = ssub.s32 %s13, 1
        %s173 = smul.u32 2, %s18
        %p174 = scmp.lt.s32.totalorder %s173, 15
        %s175 = scalar_select %p174, %s173, 15
        %s176 = smul.addr %s175, 2
        %s177 = smul.addr %s176, 8
        %s178 = scalar_lea.vmem %s0, %s177
        %p179 = pneg %p39
        %p180 = pneg %p36
        %p181 = pneg %p60
        %p182 = pneg %p57
        %p183 = pneg %p81
        %p184 = pneg %p78
        %p185 = pneg %p102
        %p186 = pneg %p99
        %p187 = pneg %p128
        %p188 = pneg %p125
        %s189 = sand.u32 %s115, 1
        %s190 = scalar_lea.sflag [#allocation3], %s189
        %s191 = sand.u32 %s115, 1
        %s192 = smul.addr %s191, 16
        %s193 = scalar_lea.vmem [#allocation2], %s192
        %s194 = smul.u32 2, %s18
        %p195 = scmp.lt.s32.totalorder %s194, 15
        %s196 = scalar_select %p195, %s194, 15
        %s197 = smul.addr %s196, 2
        %s198 = smul.addr %s197, 8
        %s199 = scalar_lea.vmem %s0, %s198
        %s200 = smul.u32 2, %s18
        %s201 = smul.u32 2, %s18
        %v202 = vld [vmem:[%s199] sm:$0xff]
        %v203 = vld [vmem:[%s199 + $0x8] sm:$0xff]
        %v204 = vld [vmem:[%s199 + $0x10] sm:$0xff]
        %v205 = vld [vmem:[%s199 + $0x18] sm:$0xff]
        %vm206 = vcmask 64512
        %v207 = vsel %vm206, %v202, 0.0
        %208 = vadd.xlane.f32.xlu0 %v207
        %v209 = vpop.xlane.xlu0 %208
        %v210 = vsel %vm206, %v204, 0.0
        %211 = vadd.xlane.f32.xlu0 %v210
        %v212 = vpop.xlane.xlu0 %211
        %v213 = vsel %vm206, %v203, 0.0
        %214 = vadd.xlane.f32.xlu0 %v213
        %v215 = vpop.xlane.xlu0 %214
        %v216 = vsel %vm206, %v205, 0.0
        %217 = vadd.xlane.f32.xlu0 %v216
        %v218 = vpop.xlane.xlu0 %217
        %v219 = vadd.f32 %v209, %v215
        %v220 = vadd.f32 %v212, %v218
        %v221 = vmul.f32 %v202, %v202
        %v222 = vmul.f32 %v204, %v204
        %v223 = vsel %vm206, %v221, 0.0
        %224 = vadd.xlane.f32.xlu0 %v223
        %v225 = vpop.xlane.xlu0 %224
        %v226 = vsel %vm206, %v222, 0.0
        %227 = vadd.xlane.f32.xlu0 %v226
        %v228 = vpop.xlane.xlu0 %227
        %v229 = vmul.f32 %v203, %v203
        %v230 = vmul.f32 %v205, %v205
        %v231 = vsel %vm206, %v229, 0.0
        %232 = vadd.xlane.f32.xlu0 %v231
        %v233 = vpop.xlane.xlu0 %232
        %v234 = vsel %vm206, %v230, 0.0
        %235 = vadd.xlane.f32.xlu0 %v234
        %v236 = vpop.xlane.xlu0 %235
        %v237 = vadd.f32 %v225, %v233
        %v238 = vadd.f32 %v228, %v236
        %v239 = vmul.f32 %v219, 0.0625
        %v240 = vmul.f32 %v220, 0.0625
        %v241 = vmul.f32 %v237, 0.0625
        %v242 = vmul.f32 %v238, 0.0625
        %v243 = vmul.f32 %v239, %v239
        %v244 = vmul.f32 %v240, %v240
        %v245 = vsub.f32 %v241, %v243
        %v246 = vsub.f32 %v242, %v244
        %v247 = vadd.f32 %v245, 1e-05
        %v248 = vadd.f32 %v246, 1e-05
        %v249 = vrsqrt.pop %v247
        %v250 = vrsqrt.pop %v248
        %v251 = vsub.f32 %v202, %v239
        %v252 = vsub.f32 %v204, %v240
        %v253 = vmul.f32 %v251, %v249
        %v254 = vmul.f32 %v252, %v250
        %v255 = vsub.f32 %v203, %v239
        %v256 = vsub.f32 %v205, %v240
        %v257 = vmul.f32 %v255, %v249
        %v258 = vmul.f32 %v256, %v250
        %v259 = vld [vmem:[%s1] sm:$0xff]
        %v260 = vld [vmem:[%s2] sm:$0xff]
        %v262 = vsel %vm206, %v257, 0
        %v265 = vsel %vm206, %v258, 0
        %v268 = vsel %vm206, %v260, 0
        %270 = vmatprep.subr.mxu0 0.0
        %271 = vmatpush1.xpose.msra.mxu0 0.0
        %272 = vmatprep.subr.mxu0 0.0
        %273 = vmatpush1.xpose.msra.mxu0 0.0
        %274 = vmatprep.subr.mxu0 0.0
        %275 = vmatpush1.xpose.msra.mxu0 0.0
        %276 = vmatprep.subr.mxu0 0.0
        %277 = vmatpush1.xpose.msra.mxu0 0.0
        %278 = vmatprep.subr.mxu0 0.0
        %279 = vmatpush1.xpose.msra.mxu0 0.0
        %280 = vmatprep.subr.mxu0 0.0
        %281 = vmatpush1.xpose.msra.mxu0 0.0
        %282 = vmatprep.subr.mxu0 0.0
        %283 = vmatpush1.xpose.msra.mxu0 0.0
        %284 = vmatprep.subr.mxu0 0.0
        %285 = vmatpush1.xpose.msra.mxu0 0.0
        %286 = vmatprep.subr.mxu0 0.0
        %287 = vmatpush1.xpose.msra.mxu0 0.0
        %288 = vmatprep.subr.mxu0 0.0
        %289 = vmatpush1.xpose.msra.mxu0 0.0
        %290 = vmatprep.subr.mxu0 0.0
        %291 = vmatpush1.xpose.msra.mxu0 0.0
        %292 = vmatprep.subr.mxu0 0.0
        %293 = vmatpush1.xpose.msra.mxu0 0.0
        %294 = vmatprep.subr.mxu0 0.0
        %295 = vmatpush1.xpose.msra.mxu0 0.0
        %296 = vmatprep.subr.mxu0 0.0
        %297 = vmatpush1.xpose.msra.mxu0 0.0
        %298 = vmatprep.subr.mxu0 0.0
        %299 = vmatpush1.xpose.msra.mxu0 0.0
        %300 = vmatprep.subr.mxu0 0.0
        %301 = vmatpush1.xpose.msra.mxu0 %v268
        %302 = vmatprep.subr.mxu0 0.0
        %303 = vmatpush2.xpose.msra.mxu0 0.0
        %304 = vmatprep.subr.mxu0 0.0
        %305 = vmatpush2.xpose.msra.mxu0 0.0
        %306 = vmatprep.subr.mxu0 0.0
        %307 = vmatpush2.xpose.msra.mxu0 0.0
        %308 = vmatprep.subr.mxu0 0.0
        %309 = vmatpush2.xpose.msra.mxu0 0.0
        %310 = vmatprep.subr.mxu0 0.0
        %311 = vmatpush2.xpose.msra.mxu0 0.0
        %312 = vmatprep.subr.mxu0 0.0
        %313 = vmatpush2.xpose.msra.mxu0 0.0
        %314 = vmatprep.subr.mxu0 0.0
        %315 = vmatpush2.xpose.msra.mxu0 0.0
        %316 = vmatprep.subr.mxu0 0.0
        %317 = vmatpush2.xpose.msra.mxu0 0.0
        %318 = vmatprep.subr.mxu0 0.0
        %319 = vmatpush2.xpose.msra.mxu0 0.0
        %320 = vmatprep.subr.mxu0 0.0
        %321 = vmatpush2.xpose.msra.mxu0 0.0
        %322 = vmatprep.subr.mxu0 0.0
        %323 = vmatpush2.xpose.msra.mxu0 0.0
        %324 = vmatprep.subr.mxu0 0.0
        %325 = vmatpush2.xpose.msra.mxu0 0.0
        %326 = vmatprep.subr.mxu0 0.0
        %327 = vmatpush2.xpose.msra.mxu0 0.0
        %328 = vmatprep.subr.mxu0 0.0
        %329 = vmatpush2.xpose.msra.mxu0 0.0
        %330 = vmatprep.subr.mxu0 0.0
        %331 = vmatpush2.xpose.msra.mxu0 0.0
        %332 = vmatprep.subr.mxu0 0.0
        %333 = vmatpush2.xpose.msra.mxu0 0.0
        %334 = vmatprep.mubr.f32.mxu0 0.0
        %335 = vmatmul.mubr.f32.gmra.mxu0 %v262
        %v336 = vpop.f32.mrf.mxu0
        %v337 = vadd.f32 0.0, %v336
        %v338 = vpop.f32.mrf.mxu0
        %339 = vmatprep.mubr.f32.mxu0 0.0
        %340 = vmatmul.mubr.f32.gmra.mxu0 %v265
        %v341 = vpop.f32.mrf.mxu0
        %v342 = vadd.f32 0.0, %v341
        %v343 = vpop.f32.mrf.mxu0
        %344 = vdwg.mxu0
        %v346 = vsel %vm206, %v253, 0
        %v349 = vsel %vm206, %v254, 0
        %v352 = vsel %vm206, %v259, 0
        %354 = vmatprep.subr.mxu0 0.0
        %355 = vmatpush1.xpose.msra.mxu0 0.0
        %356 = vmatprep.subr.mxu0 0.0
        %357 = vmatpush1.xpose.msra.mxu0 0.0
        %358 = vmatprep.subr.mxu0 0.0
        %359 = vmatpush1.xpose.msra.mxu0 0.0
        %360 = vmatprep.subr.mxu0 0.0
        %361 = vmatpush1.xpose.msra.mxu0 0.0
        %362 = vmatprep.subr.mxu0 0.0
        %363 = vmatpush1.xpose.msra.mxu0 0.0
        %364 = vmatprep.subr.mxu0 0.0
        %365 = vmatpush1.xpose.msra.mxu0 0.0
        %366 = vmatprep.subr.mxu0 0.0
        %367 = vmatpush1.xpose.msra.mxu0 0.0
        %368 = vmatprep.subr.mxu0 0.0
        %369 = vmatpush1.xpose.msra.mxu0 0.0
        %370 = vmatprep.subr.mxu0 0.0
        %371 = vmatpush1.xpose.msra.mxu0 0.0
        %372 = vmatprep.subr.mxu0 0.0
        %373 = vmatpush1.xpose.msra.mxu0 0.0
        %374 = vmatprep.subr.mxu0 0.0
        %375 = vmatpush1.xpose.msra.mxu0 0.0
        %376 = vmatprep.subr.mxu0 0.0
        %377 = vmatpush1.xpose.msra.mxu0 0.0
        %378 = vmatprep.subr.mxu0 0.0
        %379 = vmatpush1.xpose.msra.mxu0 0.0
        %380 = vmatprep.subr.mxu0 0.0
        %381 = vmatpush1.xpose.msra.mxu0 0.0
        %382 = vmatprep.subr.mxu0 0.0
        %383 = vmatpush1.xpose.msra.mxu0 0.0
        %384 = vmatprep.subr.mxu0 0.0
        %385 = vmatpush1.xpose.msra.mxu0 %v352
        %386 = vmatprep.subr.mxu0 0.0
        %387 = vmatpush2.xpose.msra.mxu0 0.0
        %388 = vmatprep.subr.mxu0 0.0
        %389 = vmatpush2.xpose.msra.mxu0 0.0
        %390 = vmatprep.subr.mxu0 0.0
        %391 = vmatpush2.xpose.msra.mxu0 0.0
        %392 = vmatprep.subr.mxu0 0.0
        %393 = vmatpush2.xpose.msra.mxu0 0.0
        %394 = vmatprep.subr.mxu0 0.0
        %395 = vmatpush2.xpose.msra.mxu0 0.0
        %396 = vmatprep.subr.mxu0 0.0
        %397 = vmatpush2.xpose.msra.mxu0 0.0
        %398 = vmatprep.subr.mxu0 0.0
        %399 = vmatpush2.xpose.msra.mxu0 0.0
        %400 = vmatprep.subr.mxu0 0.0
        %401 = vmatpush2.xpose.msra.mxu0 0.0
        %402 = vmatprep.subr.mxu0 0.0
        %403 = vmatpush2.xpose.msra.mxu0 0.0
        %404 = vmatprep.subr.mxu0 0.0
        %405 = vmatpush2.xpose.msra.mxu0 0.0
        %406 = vmatprep.subr.mxu0 0.0
        %407 = vmatpush2.xpose.msra.mxu0 0.0
        %408 = vmatprep.subr.mxu0 0.0
        %409 = vmatpush2.xpose.msra.mxu0 0.0
        %410 = vmatprep.subr.mxu0 0.0
        %411 = vmatpush2.xpose.msra.mxu0 0.0
        %412 = vmatprep.subr.mxu0 0.0
        %413 = vmatpush2.xpose.msra.mxu0 0.0
        %414 = vmatprep.subr.mxu0 0.0
        %415 = vmatpush2.xpose.msra.mxu0 0.0
        %416 = vmatprep.subr.mxu0 0.0
        %417 = vmatpush2.xpose.msra.mxu0 0.0
        %418 = vmatprep.mubr.f32.mxu0 0.0
        %419 = vmatmul.mubr.f32.gmra.mxu0 %v346
        %v420 = vpop.f32.mrf.mxu0
        %v421 = vadd.f32 %v337, %v420
        %v422 = vpop.f32.mrf.mxu0
        %423 = vmatprep.mubr.f32.mxu0 0.0
        %424 = vmatmul.mubr.f32.gmra.mxu0 %v349
        %v425 = vpop.f32.mrf.mxu0
        %v426 = vadd.f32 %v342, %v425
        %v427 = vpop.f32.mrf.mxu0
        %428 = vdwg.mxu0
        %v429 = vld [vmem:[%s3] sm:$0x1]
        %v431 = vlaneseq
        %v432 = vshrl.u32 %v431, 7
        %v433 = vsub.s32 0, %v432
        %v434 = vrot.slane %v429, %v433
        %v436 = vadd.f32 %v421, %v434
        %v437 = vadd.f32 %v426, %v434
        %438 = vst.msk [vmem:[%s193] sm:$0xff] %vm206, %v436
        %439 = vst.msk [vmem:[%s193 + $0x8] sm:$0xff] %vm206, %v437
        %s440 = sand.u32 %s115, 1
        %s441 = scalar_lea.sflag [#allocation3], %s440
        %s442 = sand.u32 %s115, 1
        %s443 = smul.addr %s442, 16
        %s444 = scalar_lea.vmem [#allocation2], %s443
        // Predicated region
        $region37: #{patch_merging_2d.1} parent=35 // pred_check
          %p445 = pneg %p125
        $region38: #{patch_merging_2d.1} parent=35 // pred_check_branch
          %447 = sbr.rel (%p445) target = $region40
        $region39: #{patch_merging_2d.1} parent=35 // pred_region
          %s448 = smul.u32 2, %s18
          %s450 = ssub.s32 256, 256
          %451 = vsyncadd %s441, %s450
          %s452 = smul.addr %s448, 128
          %s453 = scalar_lea.hbm %s4, %s452
          %s454 = sshll.u32 %s444, 4
          %s455 = int_to_ptr.vmem [resolvable:$true] %s454
          %460 = dma.vmem_to_hbm [thread:$0]  %s455, 256, %s453, %s441, 128, 128, 8
        $region40: #{patch_merging_2d.1} parent=35 // pred_fallthru
          _
      $region36: #{patch_merging_2d.1} parent=5 // pred_fallthru
        _
      %p461 = scmp.le.s32.totalorder 2, %s13
      // Predicated region
      $region41: #{patch_merging_2d.1} parent=5 // pred_check
        %p462 = pneg %p461
      $region42: #{patch_merging_2d.1} parent=5 // pred_check_branch
        %464 = sbr.rel (%p462) target = $region44
      $region43: #{patch_merging_2d.1} parent=5 // pred_region
        %s465 = ssub.s32 %s13, 2
        // Predicated region
        $region45: #{patch_merging_2d.1} parent=43 // pred_check
          %p466 = pneg %p131
        $region46: #{patch_merging_2d.1} parent=43 // pred_check_branch
          %468 = sbr.rel (%p466) target = $region48
        $region47: #{patch_merging_2d.1} parent=43 // pred_region
          %s469 = sand.u32 %s116, 1
          %s470 = scalar_lea.sflag [#allocation3], %s469
          %s471 = sand.u32 %s116, 1
          %s472 = smul.addr %s471, 16
          %s473 = scalar_lea.vmem [#allocation2], %s472
          %474 = dma.done %s470, 256
        $region48: #{patch_merging_2d.1} parent=43 // pred_fallthru
          _
      $region44: #{patch_merging_2d.1} parent=5 // pred_fallthru
        _
    $region6: #{patch_merging_2d.1} parent=1 // loop_footer
      %s17 = sadd.s32 1, %s13
    $region7: #{patch_merging_2d.1} parent=1 // loop_footer_branch
      %12 = sbr.rel target = $region3
    $region8: #{patch_merging_2d.1} parent=1 // loop_exit
      _
    %475 = vsyncpa [#allocation3], 1
    %s476 = scalar_lea.sflag [#allocation3], 1
    %477 = vsyncpa %s476, 1

</llo_original>
